<compile_context>
chip_gen: v6e
topology: v6e:2x2x1
jax: 0.10.0
libtpu: 0.0.40
codegen_flags: <defaults>
</compile_context>

<pallas_src>
import functools

import jax
import jax.numpy as jnp
from jax import lax
from jax.experimental import pallas as pl
from jax.experimental.pallas import tpu as pltpu

LANES = 128
MAX_BLOCK_ROWS = 4096                  # 4096 x 128 f32 = 2 MiB per input tile.
SMALL_N_FASTPATH = 8 * LANES           # below one (8,128) tile: plain XLA path.
_VMEM_LIMIT_BYTES = 32 * 1024 * 1024   # explicit headroom for the 2 MiB tiles.


def _cdiv(a: int, b: int) -> int:
    return -(-a // b)


def _round_up(x: int, m: int) -> int:
    return _cdiv(x, m) * m


def _sublane_multiple(dtype) -> int:
    # Minimum second-minor tile multiple for packed dtypes:
    # f32 -> 8, bf16/f16 -> 16, int8/fp8 -> 32.
    itemsize = jnp.dtype(dtype).itemsize
    return max(8, 32 // max(itemsize, 1))


def _num_core_splits() -> int:
    # The 2-way "parallel" split only helps on multi-TensorCore parts (v7x,
    # older megacore chips). On single-core "lite" chips (v5e / v6e) it is just
    # a sequential outer loop with extra overhead, so use 1 split there.
    try:
        kind = jax.devices()[0].device_kind.lower()
    except Exception:
        return 1
    if "lite" in kind or "v5e" in kind or "v6e" in kind:
        return 1
    return 2


def _l1_partial_kernel(pred_ref, gt_ref, out_ref, acc_ref, *,
                       block_rows, blocks_per_core, num_blocks, tail_rows):
    c = pl.program_id(0)            # core-split index ("parallel")
    i = pl.program_id(1)            # row-block index within this split
    blk = c * blocks_per_core + i   # logical (global) row-block id

    @pl.when(i == 0)
    def _init():
        acc_ref[...] = jnp.zeros_like(acc_ref)

    @pl.when(blk < num_blocks)      # skip grid-padding blocks of this split
    def _accumulate():
        diff = jnp.abs(pred_ref[...].astype(jnp.float32)
                       - gt_ref[...].astype(jnp.float32))

        def _vreg_partial(x):
            # Fold the (block_rows, 128) tile into a single vreg-shaped (8,128)
            # partial sum: pure VPU adds, no cross-lane/XLU work per step.
            return x.reshape(block_rows // 8, 8, LANES).sum(axis=0)

        if tail_rows == block_rows:
            # Every block is full: steady-state loop is pure sub/abs/add.
            acc_ref[...] += _vreg_partial(diff)
        else:
            is_tail = blk == num_blocks - 1

            @pl.when(jnp.logical_not(is_tail))
            def _full_block():
                acc_ref[...] += _vreg_partial(diff)

            @pl.when(is_tail)
            def _partial_block():
                # Only the final block pays for the row mask; the bound is a
                # trace-time constant, so no per-step iota offset math.
                row_ids = lax.broadcasted_iota(
                    jnp.int32, (block_rows, LANES), 0)
                acc_ref[...] += _vreg_partial(
                    jnp.where(row_ids < tail_rows, diff, 0.0))

    @pl.when(i == pl.num_programs(1) - 1)
    def _finalize():
        # One small (8,128) -> scalar reduce per core split, written to SMEM.
        out_ref[0, 0] = jnp.sum(acc_ref[...])


@jax.jit
def l1_loss(pred: jax.Array, gt: jax.Array) -> jax.Array:
    """Equivalent of nn.L1Loss()(pred, gt): mean(|pred - gt|)."""
    assert pred.shape == gt.shape, "L1Loss expects matching shapes"
    n = pred.size
    if n == 0:
        # Matches PyTorch's nan for empty inputs.
        return jnp.float32(jnp.nan)

    p = pred.reshape(-1)
    g = gt.reshape(-1)

    if n < SMALL_N_FASTPATH:
        # Tiny inputs: fixed per-grid-step overhead dominates and XLA's fused
        # elementwise+reduce is already at roofline.
        return jnp.mean(jnp.abs(p.astype(jnp.float32) - g.astype(jnp.float32)))

    rows = n // LANES          # full lane-dense rows handled by the kernel
    n_main = rows * LANES

    if n_main < n:
        # Sum the <128-element lane tail with a tiny jnp op instead of padding
        # (jnp.pad) both full tensors, which doubled HBM traffic.
        # TODO(synk): a masked in-kernel load of the last partial row would also
        # avoid the prefix-slice XLA may materialize in this rare case.
        tail = jnp.sum(jnp.abs(p[n_main:].astype(jnp.float32)
                               - g[n_main:].astype(jnp.float32)))
        p = p[:n_main]
        g = g[:n_main]
    else:
        tail = jnp.float32(0.0)

    p2 = p.reshape(rows, LANES)   # free bitcast: rows * 128 == n_main
    g2 = g.reshape(rows, LANES)

    sub = max(_sublane_multiple(pred.dtype), _sublane_multiple(gt.dtype))
    block_rows = min(MAX_BLOCK_ROWS, _round_up(rows, sub))
    num_blocks = _cdiv(rows, block_rows)
    splits = min(_num_core_splits(), num_blocks)
    blocks_per_core = _cdiv(num_blocks, splits)
    # Number of valid rows in the final (possibly partial) block.
    tail_rows = rows - (num_blocks - 1) * block_rows

    kernel = functools.partial(
        _l1_partial_kernel,
        block_rows=block_rows,
        blocks_per_core=blocks_per_core,
        num_blocks=num_blocks,
        tail_rows=tail_rows,
    )

    def in_map(c, i):
        # Clamp so a padding iteration of the last core split re-targets a
        # valid block; its accumulation is skipped in-kernel via pl.when.
        return (jnp.minimum(c * blocks_per_core + i, num_blocks - 1), 0)

    partials = pl.pallas_call(
        kernel,
        out_shape=jax.ShapeDtypeStruct((splits, 1), jnp.float32),
        grid_spec=pltpu.PrefetchScalarGridSpec(
            num_scalar_prefetch=0,
            grid=(splits, blocks_per_core),
            in_specs=[
                pl.BlockSpec((block_rows, LANES), in_map),
                pl.BlockSpec((block_rows, LANES), in_map),
            ],
            out_specs=pl.BlockSpec((1, 1), lambda c, i: (c, 0),
                                   memory_space=pltpu.SMEM),
            scratch_shapes=[pltpu.VMEM((8, LANES), jnp.float32)],
        ),
        compiler_params=pltpu.CompilerParams(
            dimension_semantics=("parallel", "arbitrary"),
            vmem_limit_bytes=_VMEM_LIMIT_BYTES),
    )(p2, g2)

    # Mean reduction (divide by the true, unpadded element count).
    total = jnp.sum(partials) + tail
    return (total / jnp.float32(n)).astype(jnp.float32)


class L1LossPallas:
    """Mirror of the PyTorch L1_loss module's forward signature."""

    def __init__(self, cfg=None):
        self.cfg = cfg

    def __call__(self, pred_dict, gt_dict):
        return l1_loss(pred_dict["y_hat"], gt_dict["y"])


if __name__ == "__main__":
    key = jax.random.PRNGKey(0)
    k1, k2, k3, k4, k5, k6 = jax.random.split(key, 6)

    module = L1LossPallas(cfg=None)

    # Primary small NCHW prediction/target pair (goes through the Pallas path).
    shape = (2, 4, 16, 16)
    y_hat = jax.random.normal(k1, shape, dtype=jnp.float32)
    y = jax.random.normal(k2, shape, dtype=jnp.float32)
    loss = jax.block_until_ready(module({"y_hat": y_hat}, {"y": y}))
    ref = jnp.mean(jnp.abs(y_hat - y))
    assert jnp.allclose(loss, ref, rtol=1e-5, atol=1e-6), (loss, ref)

    # Rows not a multiple of the block size (exercises the masked final block).
    shape_b = (2, 3, 16, 16)   # 1536 elems -> 12 rows, block_rows = 16
    a = jax.random.normal(k3, shape_b, dtype=jnp.float32)
    b = jax.random.normal(k4, shape_b, dtype=jnp.float32)
    loss_b = jax.block_until_ready(l1_loss(a, b))
    ref_b = jnp.mean(jnp.abs(a - b))
    assert jnp.allclose(loss_b, ref_b, rtol=1e-5, atol=1e-6), (loss_b, ref_b)

    # Flat size not a multiple of 128 (exercises the lane-tail path).
    shape_c = (5, 401)         # 2005 elems = 15 full rows + 85-element tail
    c1 = jax.random.normal(k5, shape_c, dtype=jnp.float32)
    c2 = jax.random.normal(k6, shape_c, dtype=jnp.float32)
    loss_c = jax.block_until_ready(l1_loss(c1, c2))
    ref_c = jnp.mean(jnp.abs(c1 - c2))
    assert jnp.allclose(loss_c, ref_c, rtol=1e-5, atol=1e-6), (loss_c, ref_c)

    print("KERNEL_OK")
</pallas_src>

<mosaic_0001>
module attributes {stable_mosaic.version = 11 : i64} {
  func.func @_l1_partial_kernel(%arg0: i32, %arg1: i32, %arg2: memref<16x128xf32, #tpu.memory_space<vmem>>, %arg3: memref<16x128xf32, #tpu.memory_space<vmem>>, %arg4: memref<1x1xf32, #tpu.memory_space<smem>>, %arg5: memref<8x128xf32, #tpu.memory_space<vmem>>) attributes {dimension_semantics = [#tpu.dimension_semantics<parallel>, #tpu.dimension_semantics<arbitrary>], iteration_bounds = array<i64: 1, 1>, scalar_prefetch = 0 : i64, scratch_operands = 1 : i64, tpu.core_type = #tpu.core_type<tc>, window_params = [{transform_indices = @transform_0, window_bounds = array<i64: 16, 128>}, {transform_indices = @transform_1, window_bounds = array<i64: 16, 128>}, {transform_indices = @transform_2, window_bounds = array<i64: 1, 1>}]} {
    %c1_i32 = arith.constant 1 : i32
    %0 = arith.muli %arg0, %c1_i32 : i32
    %1 = arith.addi %0, %arg1 : i32
    %c0_i32 = arith.constant 0 : i32
    %2 = arith.cmpi eq, %arg1, %c0_i32 : i32
    %3 = arith.extui %2 : i1 to i32
    %c0_i32_0 = arith.constant 0 : i32
    %4 = arith.cmpi ne, %3, %c0_i32_0 : i32
    scf.if %4 {
      %cst = arith.constant 0.000000e+00 : f32
      %11 = vector.broadcast %cst : f32 to vector<8x128xf32>
      %c0 = arith.constant 0 : index
      %c0_5 = arith.constant 0 : index
      %12 = vector.load %arg5[%c0, %c0_5] : memref<8x128xf32, #tpu.memory_space<vmem>>, vector<8x128xf32>
      tpu.vector_store %arg5[%c0, %c0_5], %11 {strides = array<i32>} : memref<8x128xf32, #tpu.memory_space<vmem>>, vector<8x128xf32>,
    } else {
    }
    %c1_i32_1 = arith.constant 1 : i32
    %5 = arith.cmpi slt, %1, %c1_i32_1 : i32
    %6 = arith.extui %5 : i1 to i32
    %c0_i32_2 = arith.constant 0 : i32
    %7 = arith.cmpi ne, %6, %c0_i32_2 : i32
    scf.if %7 {
      %c0 = arith.constant 0 : index
      %c0_5 = arith.constant 0 : index
      %11 = vector.load %arg2[%c0, %c0_5] : memref<16x128xf32, #tpu.memory_space<vmem>>, vector<16x128xf32>
      %c0_6 = arith.constant 0 : index
      %c0_7 = arith.constant 0 : index
      %12 = vector.load %arg3[%c0_6, %c0_7] : memref<16x128xf32, #tpu.memory_space<vmem>>, vector<16x128xf32>
      %13 = arith.subf %11, %12 : vector<16x128xf32>
      %14 = math.absf %13 : vector<16x128xf32>
      %c0_8 = arith.constant 0 : index
      %c0_9 = arith.constant 0 : index
      %15 = vector.load %arg5[%c0_8, %c0_9] : memref<8x128xf32, #tpu.memory_space<vmem>>, vector<8x128xf32>
      %16 = vector.shape_cast %14 : vector<16x128xf32> to vector<2x8x128xf32>
      %cst = arith.constant dense<0.000000e+00> : vector<8x128xf32>
      %17 = vector.multi_reduction <add>, %16, %cst [0] : vector<2x8x128xf32> to vector<8x128xf32>
      %18 = arith.addf %15, %17 : vector<8x128xf32>
      %c0_10 = arith.constant 0 : index
      %c0_11 = arith.constant 0 : index
      %19 = vector.load %arg5[%c0_10, %c0_11] : memref<8x128xf32, #tpu.memory_space<vmem>>, vector<8x128xf32>
      tpu.vector_store %arg5[%c0_10, %c0_11], %18 {strides = array<i32>} : memref<8x128xf32, #tpu.memory_space<vmem>>, vector<8x128xf32>,
    } else {
    }
    %c0_i32_3 = arith.constant 0 : i32
    %8 = arith.cmpi eq, %arg1, %c0_i32_3 : i32
    %9 = arith.extui %8 : i1 to i32
    %c0_i32_4 = arith.constant 0 : i32
    %10 = arith.cmpi ne, %9, %c0_i32_4 : i32
    scf.if %10 {
      %c0 = arith.constant 0 : index
      %c0_5 = arith.constant 0 : index
      %11 = vector.load %arg5[%c0, %c0_5] : memref<8x128xf32, #tpu.memory_space<vmem>>, vector<8x128xf32>
      %12 = vector.shape_cast %11 : vector<8x128xf32> to vector<1x8x128xf32>
      %cst = arith.constant dense<0.000000e+00> : vector<1xf32>
      %13 = vector.multi_reduction <add>, %12, %cst [1, 2] : vector<1x8x128xf32> to vector<1xf32>
      %14 = vector.shape_cast %13 : vector<1xf32> to vector<1x1x1xf32>
      %15 = vector.extract %14[0, 0, 0] : f32 from vector<1x1x1xf32>
      %c0_6 = arith.constant 0 : index
      %c0_7 = arith.constant 0 : index
      %16 = memref.load %arg4[%c0_6, %c0_7] : memref<1x1xf32, #tpu.memory_space<smem>>
      memref.store %15, %arg4[%c0_6, %c0_7] : memref<1x1xf32, #tpu.memory_space<smem>>
    } else {
    }
    return
  }
  func.func @transform_0(%arg0: i32, %arg1: i32) -> (i32, i32) {
    %c1_i32 = arith.constant 1 : i32
    %0 = arith.muli %arg0, %c1_i32 : i32
    %1 = arith.addi %0, %arg1 : i32
    %c0_i32 = arith.constant 0 : i32
    %2 = arith.minsi %1, %c0_i32 : i32
    %c0_i32_0 = arith.constant 0 : i32
    %c0_i32_1 = arith.constant 0 : i32
    return %2, %c0_i32_0 : i32, i32
  }
  func.func @transform_1(%arg0: i32, %arg1: i32) -> (i32, i32) {
    %c1_i32 = arith.constant 1 : i32
    %0 = arith.muli %arg0, %c1_i32 : i32
    %1 = arith.addi %0, %arg1 : i32
    %c0_i32 = arith.constant 0 : i32
    %2 = arith.minsi %1, %c0_i32 : i32
    %c0_i32_0 = arith.constant 0 : i32
    %c0_i32_1 = arith.constant 0 : i32
    return %2, %c0_i32_0 : i32, i32
  }
  func.func @transform_2(%arg0: i32, %arg1: i32) -> (i32, i32) {
    %c0_i32 = arith.constant 0 : i32
    %c0_i32_0 = arith.constant 0 : i32
    return %arg0, %c0_i32 : i32, i32
  }
}

</mosaic_0001>

<llo_original>
// kernel: l1_loss.1
$region0: #{l1_loss.1}
  #allocation0 [shape = 'u32[]', space=smem, size = 0x4, offset = 0x4, fixed_abs, tag = 'smem constant byte address 0x4 - core index']
  #allocation1 [shape = 'u32[144,128]{1,0:T(1,128)}', space=vmem, size = 0x12000, scoped, tag = 'internal scratch']
  #allocation2 [shape = 'f32[8,128]{1,0:T(8,128)}', space=vmem, size = 0x1000, scoped, tag = 'scratch operand']
  %s0 = inlined_call_operand.vmem [shape: f32[16,128], index: 0, kind: input, shape index: {}]
  %s1 = inlined_call_operand.vmem [shape: f32[16,128], index: 1, kind: input, shape index: {}]
  %s2 = inlined_call_operand.hbm [shape: f32[1,1], index: 2, kind: output, shape index: {}]
  %s3 = sld [smem:[#allocation0]]
  $region30: #{l1_loss.1} parent=0
    _
  %s5 = ssub.s32 1, %s3
  %s6 = scalar_select 0, %s5, %s3
  $region1: #{l1_loss.1} parent=0
    #allocation3 [shape = 'u8[512]{0}', space=smem, size = 0x200, scoped, tag = 'output window, operand 0, single buffered']
    #allocation4 [shape = 's32[1]{0}', space=sflag, size = 0x4, scoped, tag = 'scoped memory for l1_loss.1']
    %7 = vsyncpa [#allocation4], 0
    // Predicated region
    $region2: #{l1_loss.1} parent=1 // pred_check
      _
    $region3: #{l1_loss.1} parent=1 // pred_check_branch
      %9 = sbr.rel (0) target = $region5
    $region4: #{l1_loss.1} parent=1 // pred_region
      %s10 = sadd.s32 0, 0
      %p11 = scmp.lt.s32.totalorder %s10, 0
      %s12 = scalar_select %p11, %s10, 0
      %s13 = smul.u32 2, %s12
      %p14 = scmp.lt.s32.totalorder %s13, 1
      %s15 = scalar_select %p14, %s13, 1
      %s16 = smul.addr %s15, 8
      %s17 = scalar_lea.vmem %s0, %s16
      %s18 = sadd.s32 0, 0
      %p19 = scmp.lt.s32.totalorder %s18, 0
      %s20 = scalar_select %p19, %s18, 0
      %s21 = smul.u32 2, %s20
    $region5: #{l1_loss.1} parent=1 // pred_fallthru
      _
    // Predicated region
    $region6: #{l1_loss.1} parent=1 // pred_check
      _
    $region7: #{l1_loss.1} parent=1 // pred_check_branch
      %23 = sbr.rel (0) target = $region9
    $region8: #{l1_loss.1} parent=1 // pred_region
      %s24 = sadd.s32 0, 0
      %p25 = scmp.lt.s32.totalorder %s24, 0
      %s26 = scalar_select %p25, %s24, 0
      %s27 = smul.u32 2, %s26
      %p28 = scmp.lt.s32.totalorder %s27, 1
      %s29 = scalar_select %p28, %s27, 1
      %s30 = smul.addr %s29, 8
      %s31 = scalar_lea.vmem %s1, %s30
      %s32 = sadd.s32 0, 0
      %p33 = scmp.lt.s32.totalorder %s32, 0
      %s34 = scalar_select %p33, %s32, 0
      %s35 = smul.u32 2, %s34
    $region9: #{l1_loss.1} parent=1 // pred_fallthru
      _
    %s36 = sadd.s32 0, 0
    %p37 = scmp.lt.s32.totalorder %s36, 0
    %s38 = scalar_select %p37, %s36, 0
    %s39 = smul.u32 2, %s38
    %p40 = scmp.lt.s32.totalorder %s39, 1
    %s41 = scalar_select %p40, %s39, 1
    %s42 = smul.addr %s41, 8
    %s43 = scalar_lea.vmem %s0, %s42
    %s44 = sadd.s32 0, 0
    %p45 = scmp.lt.s32.totalorder %s44, 0
    %s46 = scalar_select %p45, %s44, 0
    %s47 = smul.u32 2, %s46
    %p48 = scmp.lt.s32.totalorder %s47, 1
    %s49 = scalar_select %p48, %s47, 1
    %s50 = smul.addr %s49, 8
    %s51 = scalar_lea.vmem %s1, %s50
    %s52 = sadd.s32 0, 0
    %p53 = scmp.lt.s32.totalorder %s52, 0
    %s54 = scalar_select %p53, %s52, 0
    %s55 = smul.u32 2, %s54
    %p56 = scmp.lt.s32.totalorder %s55, 1
    %s57 = scalar_select %p56, %s55, 1
    %s58 = smul.addr %s57, 8
    %s59 = scalar_lea.vmem %s0, %s58
    %s60 = sadd.s32 0, 0
    %p61 = scmp.lt.s32.totalorder %s60, 0
    %s62 = scalar_select %p61, %s60, 0
    %s63 = smul.u32 2, %s62
    %s64 = sadd.s32 0, 0
    %p65 = scmp.lt.s32.totalorder %s64, 0
    %s66 = scalar_select %p65, %s64, 0
    %s67 = smul.u32 2, %s66
    %p68 = scmp.lt.s32.totalorder %s67, 1
    %s69 = scalar_select %p68, %s67, 1
    %s70 = smul.addr %s69, 8
    %s71 = scalar_lea.vmem %s1, %s70
    %s72 = sadd.s32 0, 0
    %p73 = scmp.lt.s32.totalorder %s72, 0
    %s74 = scalar_select %p73, %s72, 0
    %s75 = smul.u32 2, %s74
    %s76 = sadd.s32 0, 0
    %p77 = scmp.eq.s32.totalorder 0, 0
    // Predicated region
    $region10: #{l1_loss.1} parent=1 // pred_check
      %p78 = pneg %p77
    $region11: #{l1_loss.1} parent=1 // pred_check_branch
      %80 = sbr.rel (%p78) target = $region13
    $region12: #{l1_loss.1} parent=1 // pred_region
      %81 = vst [vmem:[#allocation2] sm:$0xff] 0.0
    $region13: #{l1_loss.1} parent=1 // pred_fallthru
      _
    %p82 = scmp.lt.s32.totalorder %s76, 1
    // Predicated region
    $region14: #{l1_loss.1} parent=1 // pred_check
      %p83 = pneg %p82
    $region15: #{l1_loss.1} parent=1 // pred_check_branch
      %85 = sbr.rel (%p83) target = $region17
    $region16: #{l1_loss.1} parent=1 // pred_region
      %v86 = vld [vmem:[%s59] sm:$0xff]
      %v87 = vld [vmem:[%s59 + $0x8] sm:$0xff]
      %v88 = vld [vmem:[%s71] sm:$0xff]
      %v89 = vld [vmem:[%s71 + $0x8] sm:$0xff]
      %v90 = vsub.f32 %v86, %v88
      %v91 = vsub.f32 %v87, %v89
      %v92 = vand.u32 2147483647, %v90
      %v93 = vand.u32 2147483647, %v91
      %v94 = vld [vmem:[#allocation2] sm:$0xff]
      %v95 = vadd.f32 %v92, %v93
      %v96 = vadd.f32 %v94, %v95
      %97 = vst [vmem:[#allocation2] sm:$0xff] %v96
    $region17: #{l1_loss.1} parent=1 // pred_fallthru
      _
    // Predicated region
    $region18: #{l1_loss.1} parent=1 // pred_check
      %p98 = pneg %p77
    $region19: #{l1_loss.1} parent=1 // pred_check_branch
      %100 = sbr.rel (%p98) target = $region21
    $region20: #{l1_loss.1} parent=1 // pred_region
      %v101 = vld [vmem:[#allocation2] sm:$0xff]
      %102 = vadd.xlane.f32.xlu0 %v101
      %v103 = vpop.xlane.xlu0 %102
      %v104 = vrot.slane %v103, 4
      %v105 = vadd.f32 %v103, %v104
      %v106 = vrot.slane %v105, 2
      %v107 = vadd.f32 %v105, %v106
      %v108 = vrot.slane %v107, 1
      %v109 = vadd.f32 %v107, %v108
      %s110 = vtos %v109
      %s111 = scalar_lea.smem [#allocation3], 0
      %112 = sst [smem:[%s111]] %s110
    $region21: #{l1_loss.1} parent=1 // pred_fallthru
      _
    // Predicated region
    $region22: #{l1_loss.1} parent=1 // pred_check
      _
    $region23: #{l1_loss.1} parent=1 // pred_check_branch
      %114 = sbr.rel (0) target = $region25
    $region24: #{l1_loss.1} parent=1 // pred_region
      %s116 = ssub.s32 16, 16
      %117 = vsyncadd [#allocation4], %s116
      %120 = dma.smem_to_hbm [#allocation3], 16, %s2, [#allocation4]
    $region25: #{l1_loss.1} parent=1 // pred_fallthru
      _
    // Predicated region
    $region26: #{l1_loss.1} parent=1 // pred_check
      _
    $region27: #{l1_loss.1} parent=1 // pred_check_branch
      %122 = sbr.rel (0) target = $region29
    $region28: #{l1_loss.1} parent=1 // pred_region
      %123 = dma.done [#allocation4], 16
    $region29: #{l1_loss.1} parent=1 // pred_fallthru
      _
    %124 = sfence
    %125 = vsyncpa [#allocation4], 1

</llo_original>
